<compile_context>
chip_gen: v5e
topology: v5e:2x2
jax: 0.10.0
libtpu: 0.0.40
codegen_flags: <defaults>
</compile_context>

<pallas_src>
import jax
import jax.numpy as jnp
from jax.experimental import pallas as pl
from jax.experimental.pallas import tpu as pltpu


def _round_up(x, m):
    return ((x + m - 1) // m) * m


def _pooled_head_kernel(hs_ref, mask_ref,
                        w1_ref, b1_ref, w2_ref, b2_ref, w3t_ref, b3_ref,
                        out_ref,
                        acc_emb, acc_msk):
    s = pl.program_id(1)

    @pl.when(s == 0)
    def _init():
        acc_emb[...] = jnp.zeros_like(acc_emb)
        acc_msk[...] = jnp.zeros_like(acc_msk)

    # ---- masked mean-pool partial sums for this (batch-tile, seq-tile) ----
    m = mask_ref[...].astype(jnp.float32)        # [B_t, S_t, 1]
    hs = hs_ref[...].astype(jnp.float32)         # [B_t, S_t, H] (bf16 -> f32 per tile)
    acc_emb[...] += jnp.sum(hs * m, axis=1)      # [B_t, H]
    acc_msk[...] += jnp.sum(m, axis=1)           # [B_t, 1]

    # ---- epilogue: finish pooling + run the (BN-folded) head, once per batch tile ----
    @pl.when(s == pl.num_programs(1) - 1)
    def _epilogue():
        denom = jnp.maximum(acc_msk[...], 1e-9)              # clamp(min=1e-9)
        feat = acc_emb[...] / denom                          # [B_t, H]

        # Linear(H,64) + folded BN + ReLU  (Dropout = identity in eval)
        x = jnp.dot(feat, w1_ref[...], preferred_element_type=jnp.float32) + b1_ref[...]
        x = jnp.maximum(x, 0.0)

        # Linear(64,16) + folded BN + ReLU
        x = jnp.dot(x, w2_ref[...], preferred_element_type=jnp.float32) + b2_ref[...]
        x = jnp.maximum(x, 0.0)

        # Linear(16,1) as VPU multiply + lane reduce (w3 passed transposed [1,16])
        out = jnp.sum(x * w3t_ref[...], axis=-1, keepdims=True) + b3_ref[...]
        out_ref[...] = out.astype(out_ref.dtype)


def custom_model_forward(last_hidden_state, attention_mask, params,
                         *, b_tile=8, s_tile=512):
    B, S, H = last_hidden_state.shape
    eps = 1e-5

    # ---- fold eval-mode BatchNorm1d into the preceding Linear (host side) ----
    s1 = params["g1"] * jax.lax.rsqrt(params["rv1"] + eps)             # [64]
    w1f = params["w1"] * s1                                            # [H, 64]
    b1f = ((params["b1"] - params["rm1"]) * s1 + params["be1"]).reshape(1, -1)
    s2 = params["g2"] * jax.lax.rsqrt(params["rv2"] + eps)             # [16]
    w2f = params["w2"] * s2                                            # [64, 16]
    b2f = ((params["b2"] - params["rm2"]) * s2 + params["be2"]).reshape(1, -1)
    w3t = params["w3"].reshape(1, -1)                                  # [1, 16]
    b3 = params["b3"].reshape(1, 1)                                    # [1, 1]

    # ---- tile sizing (respect (8,128)/(16,128) sublane-lane constraints) ----
    b_t = max(8, (min(b_tile, _round_up(B, 8)) // 8) * 8)
    B_pad = _round_up(B, b_t)
    s_t = _round_up(min(s_tile, _round_up(S, 16)), 16)
    S_pad = _round_up(S, s_t)

    hs = last_hidden_state                                   # keep bf16 in HBM
    mask = attention_mask.astype(jnp.float32).reshape(B, S, 1)
    if B_pad != B or S_pad != S:
        hs = jnp.pad(hs, ((0, B_pad - B), (0, S_pad - S), (0, 0)))
        mask = jnp.pad(mask, ((0, B_pad - B), (0, S_pad - S), (0, 0)))

    grid = (B_pad // b_t, S_pad // s_t)
    const_spec = lambda shape: pl.BlockSpec(shape, lambda b, s: (0, 0))

    kernel = pl.pallas_call(
        _pooled_head_kernel,
        out_shape=jax.ShapeDtypeStruct((B_pad, 1), jnp.float32),
        grid_spec=pltpu.PrefetchScalarGridSpec(
            num_scalar_prefetch=0,
            grid=grid,
            in_specs=[
                pl.BlockSpec((b_t, s_t, H), lambda b, s: (b, s, 0)),   # hidden states
                pl.BlockSpec((b_t, s_t, 1), lambda b, s: (b, s, 0)),   # mask
                const_spec(w1f.shape), const_spec(b1f.shape),          # resident head params
                const_spec(w2f.shape), const_spec(b2f.shape),
                const_spec(w3t.shape), const_spec(b3.shape),
            ],
            out_specs=pl.BlockSpec((b_t, 1), lambda b, s: (b, 0)),
            scratch_shapes=[
                pltpu.VMEM((b_t, H), jnp.float32),   # sum of masked embeddings
                pltpu.VMEM((b_t, 1), jnp.float32),   # sum of mask
            ],
        ),
        compiler_params=pltpu.CompilerParams(
            dimension_semantics=("parallel", "arbitrary"),
            vmem_limit_bytes=32 * 1024 * 1024,
        ),
    )
    out = kernel(hs, mask, w1f, b1f, w2f, b2f, w3t, b3)
    return out[:B]


def init_params(key, hidden_size):
    # Linear weights ~ N(0, 0.02) as in CustomModel._init_weights; biases zero.
    # BN params/stats are given non-trivial eval-mode values so the host-side
    # folding path is exercised.  Weights are stored [in, out] (x @ W + b).
    std = 0.02
    ks = jax.random.split(key, 11)
    return {
        "w1": jax.random.normal(ks[0], (hidden_size, 64), jnp.float32) * std,
        "b1": jnp.zeros((64,), jnp.float32),
        "w2": jax.random.normal(ks[1], (64, 16), jnp.float32) * std,
        "b2": jnp.zeros((16,), jnp.float32),
        "w3": jax.random.normal(ks[2], (16, 1), jnp.float32) * std,
        "b3": jnp.zeros((1,), jnp.float32),
        "g1": 1.0 + 0.1 * jax.random.normal(ks[3], (64,), jnp.float32),
        "be1": 0.1 * jax.random.normal(ks[4], (64,), jnp.float32),
        "rm1": 0.1 * jax.random.normal(ks[5], (64,), jnp.float32),
        "rv1": jax.random.uniform(ks[6], (64,), jnp.float32, minval=0.5, maxval=1.5),
        "g2": 1.0 + 0.1 * jax.random.normal(ks[7], (16,), jnp.float32),
        "be2": 0.1 * jax.random.normal(ks[8], (16,), jnp.float32),
        "rm2": 0.1 * jax.random.normal(ks[9], (16,), jnp.float32),
        "rv2": jax.random.uniform(ks[10], (16,), jnp.float32, minval=0.5, maxval=1.5),
    }


def reference_forward(last_hidden_state, attention_mask, p):
    # Pure-JAX reference with the *unfolded* BN math (matches the PyTorch module).
    hs = last_hidden_state.astype(jnp.float32)
    m = attention_mask.astype(jnp.float32)[:, :, None]
    feat = jnp.sum(hs * m, axis=1) / jnp.maximum(jnp.sum(m, axis=1), 1e-9)
    eps = 1e-5
    x = feat @ p["w1"] + p["b1"]
    x = (x - p["rm1"]) / jnp.sqrt(p["rv1"] + eps) * p["g1"] + p["be1"]
    x = jnp.maximum(x, 0.0)
    x = x @ p["w2"] + p["b2"]
    x = (x - p["rm2"]) / jnp.sqrt(p["rv2"] + eps) * p["g2"] + p["be2"]
    x = jnp.maximum(x, 0.0)
    return x @ p["w3"] + p["b3"]


if __name__ == "__main__":
    B, S, H = 4, 40, 32  # small demo shapes; padding/tiling handles non-multiples

    key = jax.random.PRNGKey(0)
    k_hs, k_params = jax.random.split(key, 2)

    last_hidden_state = jax.random.normal(k_hs, (B, S, H), jnp.float32).astype(jnp.bfloat16)
    # Deterministic attention mask with padded tails (incl. one fully-masked row).
    lengths = jnp.array([S, S - 5, 17, 0], dtype=jnp.int32)
    attention_mask = (jnp.arange(S)[None, :] < lengths[:, None]).astype(jnp.float32)

    params = init_params(k_params, H)

    # s_tile=16 forces multiple seq tiles even at this small size, exercising
    # the accumulate-then-epilogue grid structure and the padding path.
    out = custom_model_forward(last_hidden_state, attention_mask, params,
                               b_tile=8, s_tile=16)
    out = jax.block_until_ready(out)

    ref = reference_forward(last_hidden_state, attention_mask, params)
    assert out.shape == (B, 1)
    assert jnp.allclose(out, ref, atol=1e-5, rtol=1e-4), (out, ref)

    print("KERNEL_OK")
</pallas_src>

<mosaic_0001>
module attributes {stable_mosaic.version = 11 : i64} {
  func.func @_pooled_head_kernel(%arg0: i32, %arg1: i32, %arg2: memref<8x16x32xbf16, #tpu.memory_space<vmem>>, %arg3: memref<8x16x1xf32, #tpu.memory_space<vmem>>, %arg4: memref<32x64xf32, #tpu.memory_space<vmem>>, %arg5: memref<1x64xf32, #tpu.memory_space<vmem>>, %arg6: memref<64x16xf32, #tpu.memory_space<vmem>>, %arg7: memref<1x16xf32, #tpu.memory_space<vmem>>, %arg8: memref<1x16xf32, #tpu.memory_space<vmem>>, %arg9: memref<1x1xf32, #tpu.memory_space<vmem>>, %arg10: memref<8x1xf32, #tpu.memory_space<vmem>>, %arg11: memref<8x32xf32, #tpu.memory_space<vmem>>, %arg12: memref<8x1xf32, #tpu.memory_space<vmem>>) attributes {dimension_semantics = [#tpu.dimension_semantics<parallel>, #tpu.dimension_semantics<arbitrary>], iteration_bounds = array<i64: 1, 3>, scalar_prefetch = 0 : i64, scratch_operands = 2 : i64, tpu.core_type = #tpu.core_type<tc>, window_params = [{transform_indices = @transform_0, window_bounds = array<i64: 8, 16, 32>}, {transform_indices = @transform_1, window_bounds = array<i64: 8, 16, 1>}, {pipeline_mode = #tpu.pipeline_mode<synchronous>, transform_indices = @transform_2, window_bounds = array<i64: 32, 64>}, {pipeline_mode = #tpu.pipeline_mode<synchronous>, transform_indices = @transform_3, window_bounds = array<i64: 1, 64>}, {pipeline_mode = #tpu.pipeline_mode<synchronous>, transform_indices = @transform_4, window_bounds = array<i64: 64, 16>}, {pipeline_mode = #tpu.pipeline_mode<synchronous>, transform_indices = @transform_5, window_bounds = array<i64: 1, 16>}, {pipeline_mode = #tpu.pipeline_mode<synchronous>, transform_indices = @transform_6, window_bounds = array<i64: 1, 16>}, {pipeline_mode = #tpu.pipeline_mode<synchronous>, transform_indices = @transform_7, window_bounds = array<i64: 1, 1>}, {transform_indices = @transform_8, window_bounds = array<i64: 8, 1>}]} {
    %c0_i32 = arith.constant 0 : i32
    %0 = arith.cmpi eq, %arg1, %c0_i32 : i32
    %1 = arith.extui %0 : i1 to i32
    %c0_i32_0 = arith.constant 0 : i32
    %2 = arith.cmpi ne, %1, %c0_i32_0 : i32
    scf.if %2 {
      %cst_16 = arith.constant 0.000000e+00 : f32
      %19 = vector.broadcast %cst_16 : f32 to vector<8x32xf32>
      %c0_17 = arith.constant 0 : index
      %c0_18 = arith.constant 0 : index
      %20 = vector.load %arg11[%c0_17, %c0_18] : memref<8x32xf32, #tpu.memory_space<vmem>>, vector<8x32xf32>
      tpu.vector_store %arg11[%c0_17, %c0_18], %19 {strides = array<i32>} : memref<8x32xf32, #tpu.memory_space<vmem>>, vector<8x32xf32>,
      %cst_19 = arith.constant 0.000000e+00 : f32
      %21 = vector.broadcast %cst_19 : f32 to vector<8x1xf32>
      %c0_20 = arith.constant 0 : index
      %c0_21 = arith.constant 0 : index
      %22 = vector.load %arg12[%c0_20, %c0_21] : memref<8x1xf32, #tpu.memory_space<vmem>>, vector<8x1xf32>
      tpu.vector_store %arg12[%c0_20, %c0_21], %21 {strides = array<i32>} : memref<8x1xf32, #tpu.memory_space<vmem>>, vector<8x1xf32>,
    } else {
    }
    %c0 = arith.constant 0 : index
    %c0_1 = arith.constant 0 : index
    %c0_2 = arith.constant 0 : index
    %3 = vector.load %arg3[%c0, %c0_1, %c0_2] : memref<8x16x1xf32, #tpu.memory_space<vmem>>, vector<8x16x1xf32>
    %c0_3 = arith.constant 0 : index
    %c0_4 = arith.constant 0 : index
    %c0_5 = arith.constant 0 : index
    %4 = vector.load %arg2[%c0_3, %c0_4, %c0_5] : memref<8x16x32xbf16, #tpu.memory_space<vmem>>, vector<8x16x32xbf16>
    %5 = arith.extf %4 : vector<8x16x32xbf16> to vector<8x16x32xf32>
    %c0_6 = arith.constant 0 : index
    %c0_7 = arith.constant 0 : index
    %6 = vector.load %arg11[%c0_6, %c0_7] : memref<8x32xf32, #tpu.memory_space<vmem>>, vector<8x32xf32>
    %7 = vector.broadcast %3 : vector<8x16x1xf32> to vector<8x16x32xf32>
    %8 = arith.mulf %5, %7 : vector<8x16x32xf32>
    %cst = arith.constant dense<0.000000e+00> : vector<8x32xf32>
    %9 = vector.multi_reduction <add>, %8, %cst [1] : vector<8x16x32xf32> to vector<8x32xf32>
    %10 = arith.addf %6, %9 : vector<8x32xf32>
    %c0_8 = arith.constant 0 : index
    %c0_9 = arith.constant 0 : index
    %11 = vector.load %arg11[%c0_8, %c0_9] : memref<8x32xf32, #tpu.memory_space<vmem>>, vector<8x32xf32>
    tpu.vector_store %arg11[%c0_8, %c0_9], %10 {strides = array<i32>} : memref<8x32xf32, #tpu.memory_space<vmem>>, vector<8x32xf32>,
    %c0_10 = arith.constant 0 : index
    %c0_11 = arith.constant 0 : index
    %12 = vector.load %arg12[%c0_10, %c0_11] : memref<8x1xf32, #tpu.memory_space<vmem>>, vector<8x1xf32>
    %cst_12 = arith.constant dense<0.000000e+00> : vector<8x1xf32>
    %13 = vector.multi_reduction <add>, %3, %cst_12 [1] : vector<8x16x1xf32> to vector<8x1xf32>
    %14 = arith.addf %12, %13 : vector<8x1xf32>
    %c0_13 = arith.constant 0 : index
    %c0_14 = arith.constant 0 : index
    %15 = vector.load %arg12[%c0_13, %c0_14] : memref<8x1xf32, #tpu.memory_space<vmem>>, vector<8x1xf32>
    tpu.vector_store %arg12[%c0_13, %c0_14], %14 {strides = array<i32>} : memref<8x1xf32, #tpu.memory_space<vmem>>, vector<8x1xf32>,
    %c2_i32 = arith.constant 2 : i32
    %16 = arith.cmpi eq, %arg1, %c2_i32 : i32
    %17 = arith.extui %16 : i1 to i32
    %c0_i32_15 = arith.constant 0 : i32
    %18 = arith.cmpi ne, %17, %c0_i32_15 : i32
    scf.if %18 {
      %c0_16 = arith.constant 0 : index
      %c0_17 = arith.constant 0 : index
      %19 = vector.load %arg12[%c0_16, %c0_17] : memref<8x1xf32, #tpu.memory_space<vmem>>, vector<8x1xf32>
      %cst_18 = arith.constant 9.99999971E-10 : f32
      %20 = vector.broadcast %cst_18 : f32 to vector<8x1xf32>
      %21 = arith.maximumf %19, %20 : vector<8x1xf32>
      %c0_19 = arith.constant 0 : index
      %c0_20 = arith.constant 0 : index
      %22 = vector.load %arg11[%c0_19, %c0_20] : memref<8x32xf32, #tpu.memory_space<vmem>>, vector<8x32xf32>
      %23 = vector.broadcast %21 : vector<8x1xf32> to vector<8x32xf32>
      %24 = arith.divf %22, %23 : vector<8x32xf32>
      %c0_21 = arith.constant 0 : index
      %c0_22 = arith.constant 0 : index
      %25 = vector.load %arg4[%c0_21, %c0_22] : memref<32x64xf32, #tpu.memory_space<vmem>>, vector<32x64xf32>
      %cst_23 = arith.constant dense<0.000000e+00> : vector<8x64xf32>
      %26 = tpu.matmul %24, %25, %cst_23 {dimension_numbers = #tpu.dot_dimension_numbers<[1], [0], [0], [1], [0, 0, 1, 1], [], []>} : vector<8x32xf32>, vector<32x64xf32>, vector<8x64xf32> -> vector<8x64xf32>
      %c0_24 = arith.constant 0 : index
      %c0_25 = arith.constant 0 : index
      %27 = vector.load %arg5[%c0_24, %c0_25] : memref<1x64xf32, #tpu.memory_space<vmem>>, vector<1x64xf32>
      %28 = vector.broadcast %27 : vector<1x64xf32> to vector<8x64xf32>
      %29 = arith.addf %26, %28 : vector<8x64xf32>
      %cst_26 = arith.constant 0.000000e+00 : f32
      %30 = vector.broadcast %cst_26 : f32 to vector<8x64xf32>
      %31 = arith.maximumf %29, %30 : vector<8x64xf32>
      %c0_27 = arith.constant 0 : index
      %c0_28 = arith.constant 0 : index
      %32 = vector.load %arg6[%c0_27, %c0_28] : memref<64x16xf32, #tpu.memory_space<vmem>>, vector<64x16xf32>
      %cst_29 = arith.constant dense<0.000000e+00> : vector<8x16xf32>
      %33 = tpu.matmul %31, %32, %cst_29 {dimension_numbers = #tpu.dot_dimension_numbers<[1], [0], [0], [1], [0, 0, 1, 1], [], []>} : vector<8x64xf32>, vector<64x16xf32>, vector<8x16xf32> -> vector<8x16xf32>
      %c0_30 = arith.constant 0 : index
      %c0_31 = arith.constant 0 : index
      %34 = vector.load %arg7[%c0_30, %c0_31] : memref<1x16xf32, #tpu.memory_space<vmem>>, vector<1x16xf32>
      %35 = vector.broadcast %34 : vector<1x16xf32> to vector<8x16xf32>
      %36 = arith.addf %33, %35 : vector<8x16xf32>
      %cst_32 = arith.constant 0.000000e+00 : f32
      %37 = vector.broadcast %cst_32 : f32 to vector<8x16xf32>
      %38 = arith.maximumf %36, %37 : vector<8x16xf32>
      %c0_33 = arith.constant 0 : index
      %c0_34 = arith.constant 0 : index
      %39 = vector.load %arg8[%c0_33, %c0_34] : memref<1x16xf32, #tpu.memory_space<vmem>>, vector<1x16xf32>
      %40 = vector.broadcast %39 : vector<1x16xf32> to vector<8x16xf32>
      %41 = arith.mulf %38, %40 : vector<8x16xf32>
      %cst_35 = arith.constant dense<0.000000e+00> : vector<8xf32>
      %42 = vector.multi_reduction <add>, %41, %cst_35 [1] : vector<8x16xf32> to vector<8xf32>
      %43 = vector.shape_cast %42 : vector<8xf32> to vector<8x1xf32>
      %c0_36 = arith.constant 0 : index
      %c0_37 = arith.constant 0 : index
      %44 = vector.load %arg9[%c0_36, %c0_37] : memref<1x1xf32, #tpu.memory_space<vmem>>, vector<1x1xf32>
      %45 = vector.broadcast %44 : vector<1x1xf32> to vector<8x1xf32>
      %46 = arith.addf %43, %45 : vector<8x1xf32>
      %c0_38 = arith.constant 0 : index
      %c0_39 = arith.constant 0 : index
      %47 = vector.load %arg10[%c0_38, %c0_39] : memref<8x1xf32, #tpu.memory_space<vmem>>, vector<8x1xf32>
      tpu.vector_store %arg10[%c0_38, %c0_39], %46 {strides = array<i32>} : memref<8x1xf32, #tpu.memory_space<vmem>>, vector<8x1xf32>,
    } else {
    }
    return
  }
  func.func @transform_0(%arg0: i32, %arg1: i32) -> (i32, i32, i32) {
    %c0_i32 = arith.constant 0 : i32
    %c0_i32_0 = arith.constant 0 : i32
    return %arg0, %arg1, %c0_i32 : i32, i32, i32
  }
  func.func @transform_1(%arg0: i32, %arg1: i32) -> (i32, i32, i32) {
    %c0_i32 = arith.constant 0 : i32
    %c0_i32_0 = arith.constant 0 : i32
    return %arg0, %arg1, %c0_i32 : i32, i32, i32
  }
  func.func @transform_2(%arg0: i32, %arg1: i32) -> (i32, i32) {
    %c0_i32 = arith.constant 0 : i32
    %c0_i32_0 = arith.constant 0 : i32
    %c0_i32_1 = arith.constant 0 : i32
    return %c0_i32, %c0_i32_0 : i32, i32
  }
  func.func @transform_3(%arg0: i32, %arg1: i32) -> (i32, i32) {
    %c0_i32 = arith.constant 0 : i32
    %c0_i32_0 = arith.constant 0 : i32
    %c0_i32_1 = arith.constant 0 : i32
    return %c0_i32, %c0_i32_0 : i32, i32
  }
  func.func @transform_4(%arg0: i32, %arg1: i32) -> (i32, i32) {
    %c0_i32 = arith.constant 0 : i32
    %c0_i32_0 = arith.constant 0 : i32
    %c0_i32_1 = arith.constant 0 : i32
    return %c0_i32, %c0_i32_0 : i32, i32
  }
  func.func @transform_5(%arg0: i32, %arg1: i32) -> (i32, i32) {
    %c0_i32 = arith.constant 0 : i32
    %c0_i32_0 = arith.constant 0 : i32
    %c0_i32_1 = arith.constant 0 : i32
    return %c0_i32, %c0_i32_0 : i32, i32
  }
  func.func @transform_6(%arg0: i32, %arg1: i32) -> (i32, i32) {
    %c0_i32 = arith.constant 0 : i32
    %c0_i32_0 = arith.constant 0 : i32
    %c0_i32_1 = arith.constant 0 : i32
    return %c0_i32, %c0_i32_0 : i32, i32
  }
  func.func @transform_7(%arg0: i32, %arg1: i32) -> (i32, i32) {
    %c0_i32 = arith.constant 0 : i32
    %c0_i32_0 = arith.constant 0 : i32
    %c0_i32_1 = arith.constant 0 : i32
    return %c0_i32, %c0_i32_0 : i32, i32
  }
  func.func @transform_8(%arg0: i32, %arg1: i32) -> (i32, i32) {
    %c0_i32 = arith.constant 0 : i32
    %c0_i32_0 = arith.constant 0 : i32
    return %arg0, %c0_i32 : i32, i32
  }
}

</mosaic_0001>

<llo_original>
// kernel: tpu_custom_call.1
$region0: #{tpu_custom_call.1}
  #allocation0 [shape = 'u32[]', space=smem, size = 0x4, offset = 0x4, fixed_abs, tag = 'smem constant byte address 0x4 - core index']
  #allocation1 [shape = 'u32[72,128]{1,0:T(1,128)}', space=vmem, size = 0x9000, scoped, tag = 'internal scratch']
  #allocation2 [shape = 'f32[8,32]{1,0:T(8,128)}', space=vmem, size = 0x1000, scoped, tag = 'scratch operand']
  #allocation3 [shape = 'f32[8,1]{1,0:T(8,128)}', space=vmem, size = 0x1000, scoped, tag = 'scratch operand']
  #allocation4 [shape = 'f32[1,1]{1,0:T(1,128)S(1)}', space=vmem, size = 0x200, scoped, tag = 'scoped memory for tpu_custom_call.1']
  %s0 = inlined_call_operand.vmem [shape: bf16[8,48,32], index: 0, kind: input, shape index: {}]
  %s1 = inlined_call_operand.vmem [shape: f32[8,48,1], index: 1, kind: input, shape index: {}]
  %s2 = inlined_call_operand.vmem [shape: f32[32,64], index: 2, kind: input, shape index: {}]
  %s3 = inlined_call_operand.vmem [shape: f32[1,64], index: 3, kind: input, shape index: {}]
  %s4 = inlined_call_operand.vmem [shape: f32[64,16], index: 4, kind: input, shape index: {}]
  %s5 = inlined_call_operand.vmem [shape: f32[1,16], index: 5, kind: input, shape index: {}]
  %s6 = inlined_call_operand.vmem [shape: f32[1,16], index: 6, kind: input, shape index: {}]
  %s7 = inlined_call_operand.<no memory space> [shape: f32[1,1], index: 7, kind: input, shape index: {}]
  %s8 = inlined_call_operand.vmem [shape: f32[8,1], index: 8, kind: output, shape index: {}]
  %s9 = sld [smem:[#allocation0]]
  $region152: #{tpu_custom_call.1} parent=0
    _
  %s11 = ssub.s32 1, %s9
  %s12 = scalar_select 0, %s11, %s9
  %v13 = vstv %s7
  %14 = vst [vmem:[#allocation4] sm:$0x1] %v13
  $region1: #{tpu_custom_call.1} parent=0
    #allocation5 [shape = 'u8[65536]{0}', space=vmem, size = 0x10000, scoped, tag = 'input window, operand 0']
    #allocation6 [shape = 'u8[131072]{0}', space=vmem, size = 0x20000, scoped, tag = 'input window, operand 1']
    loop: start=0, step=1, limit=5
    $region2: #{tpu_custom_call.1} parent=1 // loop_pre_header
      _
    $region3: #{tpu_custom_call.1} parent=1 // loop_header
      %s16 = sphi 0, %s20
      %p17 = scmp.ge.s32.totalorder %s16, 5
      %s23 = sphi 0, %s35
      %s24 = sphi 0, %s31
      %s25 = sphi 0, %s23
      %s26 = sphi 0, %s24
      %s27 = sphi 0, %s25
      %s28 = sphi 0, %s26
      %s40 = sphi 0, %s42
      %s43 = sphi 0, %s40
      %s44 = sphi 0, %s43
      %s60 = sphi 0, %s44
      %s68 = sphi 0, %s70
      %s71 = sphi 0, %s68
      %s72 = sphi 0, %s71
      %s88 = sphi 0, %s72
      %s92 = sphi 0, %s92
      %s94 = sphi 0, %s92
      %s95 = sphi 0, %s94
      %s109 = sphi 0, %s95
      %s113 = sphi 0, %s113
      %s115 = sphi 0, %s113
      %s116 = sphi 0, %s115
      %s130 = sphi 0, %s116
      %s134 = sphi 0, %s134
      %s136 = sphi 0, %s134
      %s137 = sphi 0, %s136
      %s151 = sphi 0, %s137
      %s155 = sphi 0, %s155
      %s157 = sphi 0, %s155
      %s158 = sphi 0, %s157
      %s172 = sphi 0, %s158
      %s176 = sphi 0, %s176
      %s178 = sphi 0, %s176
      %s179 = sphi 0, %s178
      %s193 = sphi 0, %s179
      %s197 = sphi 0, %s197
      %s199 = sphi 0, %s197
      %s200 = sphi 0, %s199
      %s214 = sphi 0, %s200
      %s220 = sphi 0, %s222
      %s223 = sphi 0, %s220
      %s224 = sphi 0, %s223
      %s240 = sphi 0, %s224
    $region4: #{tpu_custom_call.1} parent=1 // loop_header_branch
      %19 = sbr.rel (%p17) target = $region8
    $region5: #{tpu_custom_call.1} parent=1 // loop_body
      %s21 = ssub.s32 %s16, 1
      %s22 = ssub.s32 %s16, 2
      %s29 = sadd.s32 1, %s24
      %p30 = scmp.ge.s32.totalorder %s29, 3
      %s31 = scalar_select %p30, 0, %s29
      %s32 = sadd.s32 1, %s23
      %s33 = scalar_select %p30, %s32, %s23
      %p34 = scmp.ge.s32.totalorder %s33, 1
      %s35 = scalar_select %p34, 0, %s33
      %s36 = ssub.s32 %s23, %s35
      %s37 = ssub.s32 %s24, %s31
      %s38 = sor.u32 %s36, %s37
      %p39 = scmp.eq.s32.totalorder %s38, 0
      %s41 = sadd.s32 %s40, 1
      %s42 = scalar_select %p39, %s40, %s41
      %p45 = pneg %p39
      %p46 = scmp.eq.s32.totalorder %s16, 2
      %p47 = por %p45, %p46
      %p48 = scmp.ne.s32.totalorder %s40, %s43
      %p49 = scmp.eq.s32.totalorder %s16, 0
      %p50 = por %p48, %p49
      %p51 = scmp.ne.s32.totalorder %s40, %s43
      %p52 = scmp.eq.s32.totalorder %s21, 2
      %p53 = por %p51, %p52
      %p54 = scmp.ne.s32.totalorder %s43, %s44
      %p55 = scmp.eq.s32.totalorder %s21, 0
      %p56 = por %p54, %p55
      %p57 = scmp.ne.s32.totalorder %s43, %s44
      %p58 = scmp.eq.s32.totalorder %s22, 2
      %p59 = por %p57, %p58
      %p61 = scmp.ne.s32.totalorder %s44, %s60
      %p62 = scmp.eq.s32.totalorder %s22, 0
      %p63 = por %p61, %p62
      %s64 = ssub.s32 %s23, %s35
      %s65 = ssub.s32 %s24, %s31
      %s66 = sor.u32 %s64, %s65
      %p67 = scmp.eq.s32.totalorder %s66, 0
      %s69 = sadd.s32 %s68, 1
      %s70 = scalar_select %p67, %s68, %s69
      %p73 = pneg %p67
      %p74 = scmp.eq.s32.totalorder %s16, 2
      %p75 = por %p73, %p74
      %p76 = scmp.ne.s32.totalorder %s68, %s71
      %p77 = scmp.eq.s32.totalorder %s16, 0
      %p78 = por %p76, %p77
      %p79 = scmp.ne.s32.totalorder %s68, %s71
      %p80 = scmp.eq.s32.totalorder %s21, 2
      %p81 = por %p79, %p80
      %p82 = scmp.ne.s32.totalorder %s71, %s72
      %p83 = scmp.eq.s32.totalorder %s21, 0
      %p84 = por %p82, %p83
      %p85 = scmp.ne.s32.totalorder %s71, %s72
      %p86 = scmp.eq.s32.totalorder %s22, 2
      %p87 = por %p85, %p86
      %p89 = scmp.ne.s32.totalorder %s72, %s88
      %p90 = scmp.eq.s32.totalorder %s22, 0
      %p91 = por %p89, %p90
      %s93 = sadd.s32 %s92, 1
      %p96 = scmp.eq.s32.totalorder %s16, 2
      %p97 = scmp.ne.s32.totalorder %s92, %s94
      %p98 = scmp.eq.s32.totalorder %s16, 0
      %p99 = por %p97, %p98
      %p100 = scmp.ne.s32.totalorder %s92, %s94
      %p101 = scmp.eq.s32.totalorder %s21, 2
      %p102 = por %p100, %p101
      %p103 = scmp.ne.s32.totalorder %s94, %s95
      %p104 = scmp.eq.s32.totalorder %s21, 0
      %p105 = por %p103, %p104
      %p106 = scmp.ne.s32.totalorder %s94, %s95
      %p107 = scmp.eq.s32.totalorder %s22, 2
      %p108 = por %p106, %p107
      %p110 = scmp.ne.s32.totalorder %s95, %s109
      %p111 = scmp.eq.s32.totalorder %s22, 0
      %p112 = por %p110, %p111
      %s114 = sadd.s32 %s113, 1
      %p117 = scmp.eq.s32.totalorder %s16, 2
      %p118 = scmp.ne.s32.totalorder %s113, %s115
      %p119 = scmp.eq.s32.totalorder %s16, 0
      %p120 = por %p118, %p119
      %p121 = scmp.ne.s32.totalorder %s113, %s115
      %p122 = scmp.eq.s32.totalorder %s21, 2
      %p123 = por %p121, %p122
      %p124 = scmp.ne.s32.totalorder %s115, %s116
      %p125 = scmp.eq.s32.totalorder %s21, 0
      %p126 = por %p124, %p125
      %p127 = scmp.ne.s32.totalorder %s115, %s116
      %p128 = scmp.eq.s32.totalorder %s22, 2
      %p129 = por %p127, %p128
      %p131 = scmp.ne.s32.totalorder %s116, %s130
      %p132 = scmp.eq.s32.totalorder %s22, 0
      %p133 = por %p131, %p132
      %s135 = sadd.s32 %s134, 1
      %p138 = scmp.eq.s32.totalorder %s16, 2
      %p139 = scmp.ne.s32.totalorder %s134, %s136
      %p140 = scmp.eq.s32.totalorder %s16, 0
      %p141 = por %p139, %p140
      %p142 = scmp.ne.s32.totalorder %s134, %s136
      %p143 = scmp.eq.s32.totalorder %s21, 2
      %p144 = por %p142, %p143
      %p145 = scmp.ne.s32.totalorder %s136, %s137
      %p146 = scmp.eq.s32.totalorder %s21, 0
      %p147 = por %p145, %p146
      %p148 = scmp.ne.s32.totalorder %s136, %s137
      %p149 = scmp.eq.s32.totalorder %s22, 2
      %p150 = por %p148, %p149
      %p152 = scmp.ne.s32.totalorder %s137, %s151
      %p153 = scmp.eq.s32.totalorder %s22, 0
      %p154 = por %p152, %p153
      %s156 = sadd.s32 %s155, 1
      %p159 = scmp.eq.s32.totalorder %s16, 2
      %p160 = scmp.ne.s32.totalorder %s155, %s157
      %p161 = scmp.eq.s32.totalorder %s16, 0
      %p162 = por %p160, %p161
      %p163 = scmp.ne.s32.totalorder %s155, %s157
      %p164 = scmp.eq.s32.totalorder %s21, 2
      %p165 = por %p163, %p164
      %p166 = scmp.ne.s32.totalorder %s157, %s158
      %p167 = scmp.eq.s32.totalorder %s21, 0
      %p168 = por %p166, %p167
      %p169 = scmp.ne.s32.totalorder %s157, %s158
      %p170 = scmp.eq.s32.totalorder %s22, 2
      %p171 = por %p169, %p170
      %p173 = scmp.ne.s32.totalorder %s158, %s172
      %p174 = scmp.eq.s32.totalorder %s22, 0
      %p175 = por %p173, %p174
      %s177 = sadd.s32 %s176, 1
      %p180 = scmp.eq.s32.totalorder %s16, 2
      %p181 = scmp.ne.s32.totalorder %s176, %s178
      %p182 = scmp.eq.s32.totalorder %s16, 0
      %p183 = por %p181, %p182
      %p184 = scmp.ne.s32.totalorder %s176, %s178
      %p185 = scmp.eq.s32.totalorder %s21, 2
      %p186 = por %p184, %p185
      %p187 = scmp.ne.s32.totalorder %s178, %s179
      %p188 = scmp.eq.s32.totalorder %s21, 0
      %p189 = por %p187, %p188
      %p190 = scmp.ne.s32.totalorder %s178, %s179
      %p191 = scmp.eq.s32.totalorder %s22, 2
      %p192 = por %p190, %p191
      %p194 = scmp.ne.s32.totalorder %s179, %s193
      %p195 = scmp.eq.s32.totalorder %s22, 0
      %p196 = por %p194, %p195
      %s198 = sadd.s32 %s197, 1
      %p201 = scmp.eq.s32.totalorder %s16, 2
      %p202 = scmp.ne.s32.totalorder %s197, %s199
      %p203 = scmp.eq.s32.totalorder %s16, 0
      %p204 = por %p202, %p203
      %p205 = scmp.ne.s32.totalorder %s197, %s199
      %p206 = scmp.eq.s32.totalorder %s21, 2
      %p207 = por %p205, %p206
      %p208 = scmp.ne.s32.totalorder %s199, %s200
      %p209 = scmp.eq.s32.totalorder %s21, 0
      %p210 = por %p208, %p209
      %p211 = scmp.ne.s32.totalorder %s199, %s200
      %p212 = scmp.eq.s32.totalorder %s22, 2
      %p213 = por %p211, %p212
      %p215 = scmp.ne.s32.totalorder %s200, %s214
      %p216 = scmp.eq.s32.totalorder %s22, 0
      %p217 = por %p215, %p216
      %s218 = ssub.s32 %s23, %s35
      %p219 = scmp.eq.s32.totalorder %s218, 0
      %s221 = sadd.s32 %s220, 1
      %s222 = scalar_select %p219, %s220, %s221
      %p225 = pneg %p219
      %p226 = scmp.eq.s32.totalorder %s16, 2
      %p227 = por %p225, %p226
      %p228 = scmp.ne.s32.totalorder %s220, %s223
      %p229 = scmp.eq.s32.totalorder %s16, 0
      %p230 = por %p228, %p229
      %p231 = scmp.ne.s32.totalorder %s220, %s223
      %p232 = scmp.eq.s32.totalorder %s21, 2
      %p233 = por %p231, %p232
      %p234 = scmp.ne.s32.totalorder %s223, %s224
      %p235 = scmp.eq.s32.totalorder %s21, 0
      %p236 = por %p234, %p235
      %p237 = scmp.ne.s32.totalorder %s223, %s224
      %p238 = scmp.eq.s32.totalorder %s22, 2
      %p239 = por %p237, %p238
      %p241 = scmp.ne.s32.totalorder %s224, %s240
      %p242 = scmp.eq.s32.totalorder %s22, 0
      %p243 = por %p241, %p242
      %p244 = scmp.le.s32.totalorder 1, %s16
      %p245 = scmp.lt.s32.totalorder %s16, 4
      %p246 = pnand %p244, %p245
      %p247 = pneg %p246
      // Predicated region
      $region9: #{tpu_custom_call.1} parent=5 // pred_check
        _
      $region10: #{tpu_custom_call.1} parent=5 // pred_check_branch
        %249 = sbr.rel (%p246) target = $region12
      $region11: #{tpu_custom_call.1} parent=5 // pred_region
        %s250 = ssub.s32 %s16, 1
        // Predicated region
        $region13: #{tpu_custom_call.1} parent=11 // pred_check
          %p251 = pneg %p105
        $region14: #{tpu_custom_call.1} parent=11 // pred_check_branch
          %253 = sbr.rel (%p251) target = $region16
        $region15: #{tpu_custom_call.1} parent=11 // pred_region
          _
        $region16: #{tpu_custom_call.1} parent=11 // pred_fallthru
          _
        // Predicated region
        $region17: #{tpu_custom_call.1} parent=11 // pred_check
          %p254 = pneg %p126
        $region18: #{tpu_custom_call.1} parent=11 // pred_check_branch
          %256 = sbr.rel (%p254) target = $region20
        $region19: #{tpu_custom_call.1} parent=11 // pred_region
          _
        $region20: #{tpu_custom_call.1} parent=11 // pred_fallthru
          _
        // Predicated region
        $region21: #{tpu_custom_call.1} parent=11 // pred_check
          %p257 = pneg %p147
        $region22: #{tpu_custom_call.1} parent=11 // pred_check_branch
          %259 = sbr.rel (%p257) target = $region24
        $region23: #{tpu_custom_call.1} parent=11 // pred_region
          _
        $region24: #{tpu_custom_call.1} parent=11 // pred_fallthru
          _
        // Predicated region
        $region25: #{tpu_custom_call.1} parent=11 // pred_check
          %p260 = pneg %p168
        $region26: #{tpu_custom_call.1} parent=11 // pred_check_branch
          %262 = sbr.rel (%p260) target = $region28
        $region27: #{tpu_custom_call.1} parent=11 // pred_region
          _
        $region28: #{tpu_custom_call.1} parent=11 // pred_fallthru
          _
        // Predicated region
        $region29: #{tpu_custom_call.1} parent=11 // pred_check
          %p263 = pneg %p189
        $region30: #{tpu_custom_call.1} parent=11 // pred_check_branch
          %265 = sbr.rel (%p263) target = $region32
        $region31: #{tpu_custom_call.1} parent=11 // pred_region
          _
        $region32: #{tpu_custom_call.1} parent=11 // pred_fallthru
          _
        // Predicated region
        $region33: #{tpu_custom_call.1} parent=11 // pred_check
          %p266 = pneg %p210
        $region34: #{tpu_custom_call.1} parent=11 // pred_check_branch
          %268 = sbr.rel (%p266) target = $region36
        $region35: #{tpu_custom_call.1} parent=11 // pred_region
          _
        $region36: #{tpu_custom_call.1} parent=11 // pred_fallthru
          _
      $region12: #{tpu_custom_call.1} parent=5 // pred_fallthru
        _
      %p269 = scmp.lt.s32.totalorder %s16, 3
      // Predicated region
      $region37: #{tpu_custom_call.1} parent=5 // pred_check
        %p270 = pneg %p269
      $region38: #{tpu_custom_call.1} parent=5 // pred_check_branch
        %272 = sbr.rel (%p270) target = $region40
      $region39: #{tpu_custom_call.1} parent=5 // pred_region
        // Predicated region
        $region41: #{tpu_custom_call.1} parent=39 // pred_check
          %p273 = pneg %p50
        $region42: #{tpu_custom_call.1} parent=39 // pred_check_branch
          %275 = sbr.rel (%p273) target = $region44
        $region43: #{tpu_custom_call.1} parent=39 // pred_region
          %s276 = sand.u32 %s40, 1
          %s277 = sand.u32 %s40, 1
          %s278 = smul.addr %s277, 64
          %s279 = scalar_lea.vmem [#allocation5], %s278
          %s280 = smul.u32 8, %s23
          %s281 = smul.u32 2, %s24
          %s282 = smul.addr %s280, 6
          %s283 = sadd.s32 %s281, %s282
          %s284 = smul.addr %s283, 4
          %s285 = scalar_lea.vmem %s0, %s284
          // Predicated region
          $region45: #{tpu_custom_call.1} parent=43 // pred_check
            _
          $region46: #{tpu_custom_call.1} parent=43 // pred_check_branch
            %287 = sbr.rel (0) target = $region48
          $region47: #{tpu_custom_call.1} parent=43 // pred_region
            // Predicated region
            $region49: #{tpu_custom_call.1} parent=47 // pred_check
              _
            $region50: #{tpu_custom_call.1} parent=47 // pred_check_branch
              %289 = sbr.rel target = $region52
            $region51: #{tpu_custom_call.1} parent=47 // pred_region
              // Predicated region
              $region64: #{tpu_custom_call.1} parent=51 // pred_check
                _
              $region65: #{tpu_custom_call.1} parent=51 // pred_check_branch
                %335 = sbr.rel (0) target = $region67
              $region66: #{tpu_custom_call.1} parent=51 // pred_region
                loop: start=0, step=1, limit=1
                $region68: #{tpu_custom_call.1} parent=66 // loop_pre_header
                  _
                $region69: #{tpu_custom_call.1} parent=66 // loop_header
                  %s337 = sphi 0, %s341
                  %p338 = scmp.ge.s32.totalorder %s337, 1
                  %s342 = sphi %s285, %s285
                  %s343 = sphi %s279, %s279
                $region70: #{tpu_custom_call.1} parent=66 // loop_header_branch
                  %340 = sbr.rel (%p338) target = $region74
                $region71: #{tpu_custom_call.1} parent=66 // loop_body
                  _
                $region72: #{tpu_custom_call.1} parent=66 // loop_footer
                  %s341 = sadd.s32 1, %s337
                $region73: #{tpu_custom_call.1} parent=66 // loop_footer_branch
                  %336 = sbr.rel target = $region69
                $region74: #{tpu_custom_call.1} parent=66 // loop_exit
                  _
                %s345 = ssub.s32 16, 1
                loop: start=0, step=1, limit=1
                $region75: #{tpu_custom_call.1} parent=66 // loop_pre_header
                  _
                $region76: #{tpu_custom_call.1} parent=66 // loop_header
                  %s347 = sphi 0, %s351
                  %p348 = scmp.ge.s32.totalorder %s347, 1
                  %s352 = sphi %s285, %s285
                  %s353 = sphi %s279, %s279
                $region77: #{tpu_custom_call.1} parent=66 // loop_header_branch
                  %350 = sbr.rel (%p348) target = $region81
                $region78: #{tpu_custom_call.1} parent=66 // loop_body
                  %v354 = vld [vmem:[%s352] sm:%s345]
                  %355 = vst [vmem:[%s353] sm:%s345] %v354
                  %v356 = vld [vmem:[%s352 + $0x4] sm:%s345]
                  %357 = vst [vmem:[%s353 + $0x4] sm:%s345] %v356
                  %v358 = vld [vmem:[%s352 + $0x18] sm:%s345]
                  %359 = vst [vmem:[%s353 + $0x8] sm:%s345] %v358
                  %v360 = vld [vmem:[%s352 + $0x1c] sm:%s345]
                  %361 = vst [vmem:[%s353 + $0xc] sm:%s345] %v360
                  %v362 = vld [vmem:[%s352 + $0x30] sm:%s345]
                  %363 = vst [vmem:[%s353 + $0x10] sm:%s345] %v362
                  %v364 = vld [vmem:[%s352 + $0x34] sm:%s345]
                  %365 = vst [vmem:[%s353 + $0x14] sm:%s345] %v364
                  %v366 = vld [vmem:[%s352 + $0x48] sm:%s345]
                  %367 = vst [vmem:[%s353 + $0x18] sm:%s345] %v366
                  %v368 = vld [vmem:[%s352 + $0x4c] sm:%s345]
                  %369 = vst [vmem:[%s353 + $0x1c] sm:%s345] %v368
                  %v370 = vld [vmem:[%s352 + $0x60] sm:%s345]
                  %371 = vst [vmem:[%s353 + $0x20] sm:%s345] %v370
                  %v372 = vld [vmem:[%s352 + $0x64] sm:%s345]
                  %373 = vst [vmem:[%s353 + $0x24] sm:%s345] %v372
                  %v374 = vld [vmem:[%s352 + $0x78] sm:%s345]
                  %375 = vst [vmem:[%s353 + $0x28] sm:%s345] %v374
                  %v376 = vld [vmem:[%s352 + $0x7c] sm:%s345]
                  %377 = vst [vmem:[%s353 + $0x2c] sm:%s345] %v376
                  %v378 = vld [vmem:[%s352 + $0x90] sm:%s345]
                  %379 = vst [vmem:[%s353 + $0x30] sm:%s345] %v378
                  %v380 = vld [vmem:[%s352 + $0x94] sm:%s345]
                  %381 = vst [vmem:[%s353 + $0x34] sm:%s345] %v380
                  %v382 = vld [vmem:[%s352 + $0xa8] sm:%s345]
                  %383 = vst [vmem:[%s353 + $0x38] sm:%s345] %v382
                  %v384 = vld [vmem:[%s352 + $0xac] sm:%s345]
                  %385 = vst [vmem:[%s353 + $0x3c] sm:%s345] %v384
                $region79: #{tpu_custom_call.1} parent=66 // loop_footer
                  %s351 = sadd.s32 1, %s347
                $region80: #{tpu_custom_call.1} parent=66 // loop_footer_branch
                  %346 = sbr.rel target = $region76
                $region81: #{tpu_custom_call.1} parent=66 // loop_exit
                  _
              $region67: #{tpu_custom_call.1} parent=51 // pred_fallthru
                _
            $region52: #{tpu_custom_call.1} parent=47 // pred_fallthru
              _
            // Predicated region
            $region53: #{tpu_custom_call.1} parent=47 // pred_check
              _
            $region54: #{tpu_custom_call.1} parent=47 // pred_check_branch
              %291 = sbr.rel (0) target = $region56
            $region55: #{tpu_custom_call.1} parent=47 // pred_region
              %s293 = ssub.s32 16, 1
              loop: start=0, step=1, limit=1
              $region57: #{tpu_custom_call.1} parent=55 // loop_pre_header
                _
              $region58: #{tpu_custom_call.1} parent=55 // loop_header
                %s295 = sphi 0, %s299
                %p296 = scmp.ge.s32.totalorder %s295, 1
                %s300 = sphi %s285, %s285
                %s301 = sphi %s279, %s279
              $region59: #{tpu_custom_call.1} parent=55 // loop_header_branch
                %298 = sbr.rel (%p296) target = $region63
              $region60: #{tpu_custom_call.1} parent=55 // loop_body
                %v302 = vld [vmem:[%s300] sm:%s293]
                %303 = vst [vmem:[%s301] sm:%s293] %v302
                %v304 = vld [vmem:[%s300 + $0x4] sm:%s293]
                %305 = vst [vmem:[%s301 + $0x4] sm:%s293] %v304
                %v306 = vld [vmem:[%s300 + $0x18] sm:%s293]
                %307 = vst [vmem:[%s301 + $0x8] sm:%s293] %v306
                %v308 = vld [vmem:[%s300 + $0x1c] sm:%s293]
                %309 = vst [vmem:[%s301 + $0xc] sm:%s293] %v308
                %v310 = vld [vmem:[%s300 + $0x30] sm:%s293]
                %311 = vst [vmem:[%s301 + $0x10] sm:%s293] %v310
                %v312 = vld [vmem:[%s300 + $0x34] sm:%s293]
                %313 = vst [vmem:[%s301 + $0x14] sm:%s293] %v312
                %v314 = vld [vmem:[%s300 + $0x48] sm:%s293]
                %315 = vst [vmem:[%s301 + $0x18] sm:%s293] %v314
                %v316 = vld [vmem:[%s300 + $0x4c] sm:%s293]
                %317 = vst [vmem:[%s301 + $0x1c] sm:%s293] %v316
                %v318 = vld [vmem:[%s300 + $0x60] sm:%s293]
                %319 = vst [vmem:[%s301 + $0x20] sm:%s293] %v318
                %v320 = vld [vmem:[%s300 + $0x64] sm:%s293]
                %321 = vst [vmem:[%s301 + $0x24] sm:%s293] %v320
                %v322 = vld [vmem:[%s300 + $0x78] sm:%s293]
                %323 = vst [vmem:[%s301 + $0x28] sm:%s293] %v322
                %v324 = vld [vmem:[%s300 + $0x7c] sm:%s293]
                %325 = vst [vmem:[%s301 + $0x2c] sm:%s293] %v324
                %v326 = vld [vmem:[%s300 + $0x90] sm:%s293]
                %327 = vst [vmem:[%s301 + $0x30] sm:%s293] %v326
                %v328 = vld [vmem:[%s300 + $0x94] sm:%s293]
                %329 = vst [vmem:[%s301 + $0x34] sm:%s293] %v328
                %v330 = vld [vmem:[%s300 + $0xa8] sm:%s293]
                %331 = vst [vmem:[%s301 + $0x38] sm:%s293] %v330
                %v332 = vld [vmem:[%s300 + $0xac] sm:%s293]
                %333 = vst [vmem:[%s301 + $0x3c] sm:%s293] %v332
              $region61: #{tpu_custom_call.1} parent=55 // loop_footer
                %s299 = sadd.s32 1, %s295
              $region62: #{tpu_custom_call.1} parent=55 // loop_footer_branch
                %294 = sbr.rel target = $region58
              $region63: #{tpu_custom_call.1} parent=55 // loop_exit
                _
            $region56: #{tpu_custom_call.1} parent=47 // pred_fallthru
              _
          $region48: #{tpu_custom_call.1} parent=43 // pred_fallthru
            _
          %386 = vnop
        $region44: #{tpu_custom_call.1} parent=39 // pred_fallthru
          _
        // Predicated region
        $region82: #{tpu_custom_call.1} parent=39 // pred_check
          %p387 = pneg %p78
        $region83: #{tpu_custom_call.1} parent=39 // pred_check_branch
          %389 = sbr.rel (%p387) target = $region85
        $region84: #{tpu_custom_call.1} parent=39 // pred_region
          %s390 = sand.u32 %s68, 1
          %s391 = sand.u32 %s68, 1
          %s392 = smul.addr %s391, 128
          %s393 = scalar_lea.vmem [#allocation6], %s392
          %s394 = smul.u32 8, %s23
          %s395 = smul.u32 2, %s24
          %s396 = smul.addr %s394, 6
          %s397 = sadd.s32 %s395, %s396
          %s398 = smul.addr %s397, 8
          %s399 = scalar_lea.vmem %s1, %s398
          // Predicated region
          $region86: #{tpu_custom_call.1} parent=84 // pred_check
            _
          $region87: #{tpu_custom_call.1} parent=84 // pred_check_branch
            %401 = sbr.rel (0) target = $region89
          $region88: #{tpu_custom_call.1} parent=84 // pred_region
            // Predicated region
            $region90: #{tpu_custom_call.1} parent=88 // pred_check
              _
            $region91: #{tpu_custom_call.1} parent=88 // pred_check_branch
              %403 = sbr.rel (0) target = $region93
            $region92: #{tpu_custom_call.1} parent=88 // pred_region
              // Predicated region
              $region105: #{tpu_custom_call.1} parent=92 // pred_check
                _
              $region106: #{tpu_custom_call.1} parent=92 // pred_check_branch
                %449 = sbr.rel (0) target = $region108
              $region107: #{tpu_custom_call.1} parent=92 // pred_region
                loop: start=0, step=1, limit=1
                $region109: #{tpu_custom_call.1} parent=107 // loop_pre_header
                  _
                $region110: #{tpu_custom_call.1} parent=107 // loop_header
                  %s451 = sphi 0, %s455
                  %p452 = scmp.ge.s32.totalorder %s451, 1
                  %s456 = sphi %s399, %s399
                  %s457 = sphi %s393, %s393
                $region111: #{tpu_custom_call.1} parent=107 // loop_header_branch
                  %454 = sbr.rel (%p452) target = $region115
                $region112: #{tpu_custom_call.1} parent=107 // loop_body
                  %v458 = vld [vmem:[%s456] sm:$0xff]
                  %459 = vst [vmem:[%s457] sm:$0xff] %v458
                  %v460 = vld [vmem:[%s456 + $0x8] sm:$0xff]
                  %461 = vst [vmem:[%s457 + $0x8] sm:$0xff] %v460
                  %v462 = vld [vmem:[%s456 + $0x30] sm:$0xff]
                  %463 = vst [vmem:[%s457 + $0x10] sm:$0xff] %v462
                  %v464 = vld [vmem:[%s456 + $0x38] sm:$0xff]
                  %465 = vst [vmem:[%s457 + $0x18] sm:$0xff] %v464
                  %v466 = vld [vmem:[%s456 + $0x60] sm:$0xff]
                  %467 = vst [vmem:[%s457 + $0x20] sm:$0xff] %v466
                  %v468 = vld [vmem:[%s456 + $0x68] sm:$0xff]
                  %469 = vst [vmem:[%s457 + $0x28] sm:$0xff] %v468
                  %v470 = vld [vmem:[%s456 + $0x90] sm:$0xff]
                  %471 = vst [vmem:[%s457 + $0x30] sm:$0xff] %v470
                  %v472 = vld [vmem:[%s456 + $0x98] sm:$0xff]
                  %473 = vst [vmem:[%s457 + $0x38] sm:$0xff] %v472
                  %v474 = vld [vmem:[%s456 + $0xc0] sm:$0xff]
                  %475 = vst [vmem:[%s457 + $0x40] sm:$0xff] %v474
                  %v476 = vld [vmem:[%s456 + $0xc8] sm:$0xff]
                  %477 = vst [vmem:[%s457 + $0x48] sm:$0xff] %v476
                  %v478 = vld [vmem:[%s456 + $0xf0] sm:$0xff]
                  %479 = vst [vmem:[%s457 + $0x50] sm:$0xff] %v478
                  %v480 = vld [vmem:[%s456 + $0xf8] sm:$0xff]
                  %481 = vst [vmem:[%s457 + $0x58] sm:$0xff] %v480
                  %v482 = vld [vmem:[%s456 + $0x120] sm:$0xff]
                  %483 = vst [vmem:[%s457 + $0x60] sm:$0xff] %v482
                  %v484 = vld [vmem:[%s456 + $0x128] sm:$0xff]
                  %485 = vst [vmem:[%s457 + $0x68] sm:$0xff] %v484
                  %v486 = vld [vmem:[%s456 + $0x150] sm:$0xff]
                  %487 = vst [vmem:[%s457 + $0x70] sm:$0xff] %v486
                  %v488 = vld [vmem:[%s456 + $0x158] sm:$0xff]
                  %489 = vst [vmem:[%s457 + $0x78] sm:$0xff] %v488
                $region113: #{tpu_custom_call.1} parent=107 // loop_footer
                  %s455 = sadd.s32 1, %s451
                $region114: #{tpu_custom_call.1} parent=107 // loop_footer_branch
                  %450 = sbr.rel target = $region110
                $region115: #{tpu_custom_call.1} parent=107 // loop_exit
                  _
              $region108: #{tpu_custom_call.1} parent=92 // pred_fallthru
                _
              // Predicated region
              $region116: #{tpu_custom_call.1} parent=92 // pred_check
                _
              $region117: #{tpu_custom_call.1} parent=92 // pred_check_branch
                %491 = sbr.rel target = $region119
              $region118: #{tpu_custom_call.1} parent=92 // pred_region
                _
              $region119: #{tpu_custom_call.1} parent=92 // pred_fallthru
                _
            $region93: #{tpu_custom_call.1} parent=88 // pred_fallthru
              _
            // Predicated region
            $region94: #{tpu_custom_call.1} parent=88 // pred_check
              _
            $region95: #{tpu_custom_call.1} parent=88 // pred_check_branch
              %405 = sbr.rel target = $region97
            $region96: #{tpu_custom_call.1} parent=88 // pred_region
              %s407 = ssub.s32 256, 1
              loop: start=0, step=1, limit=1
              $region98: #{tpu_custom_call.1} parent=96 // loop_pre_header
                _
              $region99: #{tpu_custom_call.1} parent=96 // loop_header
                %s409 = sphi 0, %s413
                %p410 = scmp.ge.s32.totalorder %s409, 1
                %s414 = sphi %s399, %s399
                %s415 = sphi %s393, %s393
              $region100: #{tpu_custom_call.1} parent=96 // loop_header_branch
                %412 = sbr.rel (%p410) target = $region104
              $region101: #{tpu_custom_call.1} parent=96 // loop_body
                %v416 = vld [vmem:[%s414] sm:%s407]
                %417 = vst [vmem:[%s415] sm:%s407] %v416
                %v418 = vld [vmem:[%s414 + $0x8] sm:%s407]
                %419 = vst [vmem:[%s415 + $0x8] sm:%s407] %v418
                %v420 = vld [vmem:[%s414 + $0x30] sm:%s407]
                %421 = vst [vmem:[%s415 + $0x10] sm:%s407] %v420
                %v422 = vld [vmem:[%s414 + $0x38] sm:%s407]
                %423 = vst [vmem:[%s415 + $0x18] sm:%s407] %v422
                %v424 = vld [vmem:[%s414 + $0x60] sm:%s407]
                %425 = vst [vmem:[%s415 + $0x20] sm:%s407] %v424
                %v426 = vld [vmem:[%s414 + $0x68] sm:%s407]
                %427 = vst [vmem:[%s415 + $0x28] sm:%s407] %v426
                %v428 = vld [vmem:[%s414 + $0x90] sm:%s407]
                %429 = vst [vmem:[%s415 + $0x30] sm:%s407] %v428
                %v430 = vld [vmem:[%s414 + $0x98] sm:%s407]
                %431 = vst [vmem:[%s415 + $0x38] sm:%s407] %v430
                %v432 = vld [vmem:[%s414 + $0xc0] sm:%s407]
                %433 = vst [vmem:[%s415 + $0x40] sm:%s407] %v432
                %v434 = vld [vmem:[%s414 + $0xc8] sm:%s407]
                %435 = vst [vmem:[%s415 + $0x48] sm:%s407] %v434
                %v436 = vld [vmem:[%s414 + $0xf0] sm:%s407]
                %437 = vst [vmem:[%s415 + $0x50] sm:%s407] %v436
                %v438 = vld [vmem:[%s414 + $0xf8] sm:%s407]
                %439 = vst [vmem:[%s415 + $0x58] sm:%s407] %v438
                %v440 = vld [vmem:[%s414 + $0x120] sm:%s407]
                %441 = vst [vmem:[%s415 + $0x60] sm:%s407] %v440
                %v442 = vld [vmem:[%s414 + $0x128] sm:%s407]
                %443 = vst [vmem:[%s415 + $0x68] sm:%s407] %v442
                %v444 = vld [vmem:[%s414 + $0x150] sm:%s407]
                %445 = vst [vmem:[%s415 + $0x70] sm:%s407] %v444
                %v446 = vld [vmem:[%s414 + $0x158] sm:%s407]
                %447 = vst [vmem:[%s415 + $0x78] sm:%s407] %v446
              $region102: #{tpu_custom_call.1} parent=96 // loop_footer
                %s413 = sadd.s32 1, %s409
              $region103: #{tpu_custom_call.1} parent=96 // loop_footer_branch
                %408 = sbr.rel target = $region99
              $region104: #{tpu_custom_call.1} parent=96 // loop_exit
                _
            $region97: #{tpu_custom_call.1} parent=88 // pred_fallthru
              _
          $region89: #{tpu_custom_call.1} parent=84 // pred_fallthru
            _
          %492 = vnop
        $region85: #{tpu_custom_call.1} parent=39 // pred_fallthru
          _
      $region40: #{tpu_custom_call.1} parent=5 // pred_fallthru
        _
      %p493 = scmp.le.s32.totalorder 1, %s16
      %p494 = scmp.lt.s32.totalorder %s16, 4
      %p495 = pnand %p493, %p494
      %p496 = pneg %p495
      // Predicated region
      $region120: #{tpu_custom_call.1} parent=5 // pred_check
        _
      $region121: #{tpu_custom_call.1} parent=5 // pred_check_branch
        %498 = sbr.rel (%p495) target = $region123
      $region122: #{tpu_custom_call.1} parent=5 // pred_region
        %s499 = ssub.s32 %s16, 1
        %s500 = sand.u32 %s43, 1
        %s501 = sand.u32 %s43, 1
        %s502 = smul.addr %s501, 64
        %s503 = scalar_lea.vmem [#allocation5], %s502
        // Predicated region
        $region124: #{tpu_custom_call.1} parent=122 // pred_check
          %p504 = pneg %p56
        $region125: #{tpu_custom_call.1} parent=122 // pred_check_branch
          %506 = sbr.rel (%p504) target = $region127
        $region126: #{tpu_custom_call.1} parent=122 // pred_region
          _
        $region127: #{tpu_custom_call.1} parent=122 // pred_fallthru
          _
        %s507 = sand.u32 %s71, 1
        %s508 = sand.u32 %s71, 1
        %s509 = smul.addr %s508, 128
        %s510 = scalar_lea.vmem [#allocation6], %s509
        // Predicated region
        $region128: #{tpu_custom_call.1} parent=122 // pred_check
          %p511 = pneg %p84
        $region129: #{tpu_custom_call.1} parent=122 // pred_check_branch
          %513 = sbr.rel (%p511) target = $region131
        $region130: #{tpu_custom_call.1} parent=122 // pred_region
          _
        $region131: #{tpu_custom_call.1} parent=122 // pred_fallthru
          _
        %s514 = sand.u32 %s43, 1
        %s515 = sand.u32 %s43, 1
        %s516 = smul.addr %s515, 64
        %s517 = scalar_lea.vmem [#allocation5], %s516
        %p518 = pneg %p56
        %p519 = pneg %p53
        %s520 = sand.u32 %s71, 1
        %s521 = sand.u32 %s71, 1
        %s522 = smul.addr %s521, 128
        %s523 = scalar_lea.vmem [#allocation6], %s522
        %p524 = pneg %p84
        %p525 = pneg %p81
        %p526 = pneg %p105
        %p527 = pneg %p102
        %p528 = pneg %p126
        %p529 = pneg %p123
        %p530 = pneg %p147
        %p531 = pneg %p144
        %p532 = pneg %p168
        %p533 = pneg %p165
        %p534 = pneg %p189
        %p535 = pneg %p186
        %p536 = pneg %p210
        %p537 = pneg %p207
        %p538 = pneg %p236
        %p539 = pneg %p233
        %p540 = scmp.lt.s32.totalorder %s25, 0
        %s541 = scalar_select %p540, %s25, 0
        %s542 = smul.addr %s541, 8
        %s543 = scalar_lea.vmem %s8, %s542
        %s544 = smul.u32 8, %s25
        %s545 = smul.u32 2, %s26
        %s546 = smul.u32 8, %s25
        %s547 = smul.u32 2, %s26
        %p548 = scmp.lt.s32.totalorder %s25, 0
        %s549 = scalar_select %p548, %s25, 0
        %s550 = smul.addr %s549, 8
        %s551 = scalar_lea.vmem %s8, %s550
        %p552 = scmp.eq.s32.totalorder %s26, 0
        // Predicated region
        $region132: #{tpu_custom_call.1} parent=122 // pred_check
          %p553 = pneg %p552
        $region133: #{tpu_custom_call.1} parent=122 // pred_check_branch
          %555 = sbr.rel (%p553) target = $region135
        $region134: #{tpu_custom_call.1} parent=122 // pred_region
          %vm556 = vcmask 261120
          %557 = vst.msk [vmem:[#allocation2] sm:$0xff] %vm556, 0.0
          %vm558 = vcmask 7168
          %559 = vst.msk [vmem:[#allocation3] sm:$0xff] %vm558, 0.0
        $region135: #{tpu_custom_call.1} parent=122 // pred_fallthru
          _
        %v560 = vld [vmem:[%s510] sm:$0xff]
        %v561 = vld [vmem:[%s510 + $0x8] sm:$0xff]
        %v562 = vld [vmem:[%s510 + $0x10] sm:$0xff]
        %v563 = vld [vmem:[%s510 + $0x18] sm:$0xff]
        %v564 = vld [vmem:[%s510 + $0x20] sm:$0xff]
        %v565 = vld [vmem:[%s510 + $0x28] sm:$0xff]
        %v566 = vld [vmem:[%s510 + $0x30] sm:$0xff]
        %v567 = vld [vmem:[%s510 + $0x38] sm:$0xff]
        %v568 = vld [vmem:[%s510 + $0x40] sm:$0xff]
        %v569 = vld [vmem:[%s510 + $0x48] sm:$0xff]
        %v570 = vld [vmem:[%s510 + $0x50] sm:$0xff]
        %v571 = vld [vmem:[%s510 + $0x58] sm:$0xff]
        %v572 = vld [vmem:[%s510 + $0x60] sm:$0xff]
        %v573 = vld [vmem:[%s510 + $0x68] sm:$0xff]
        %v574 = vld [vmem:[%s510 + $0x70] sm:$0xff]
        %v575 = vld [vmem:[%s510 + $0x78] sm:$0xff]
        %v576 = vld [vmem:[%s503] sm:$0xf]
        %v577 = vld [vmem:[%s503 + $0x4] sm:$0xf]
        %v578 = vld [vmem:[%s503 + $0x8] sm:$0xf]
        %v579 = vld [vmem:[%s503 + $0xc] sm:$0xf]
        %v580 = vld [vmem:[%s503 + $0x10] sm:$0xf]
        %v581 = vld [vmem:[%s503 + $0x14] sm:$0xf]
        %v582 = vld [vmem:[%s503 + $0x18] sm:$0xf]
        %v583 = vld [vmem:[%s503 + $0x1c] sm:$0xf]
        %v584 = vld [vmem:[%s503 + $0x20] sm:$0xf]
        %v585 = vld [vmem:[%s503 + $0x24] sm:$0xf]
        %v586 = vld [vmem:[%s503 + $0x28] sm:$0xf]
        %v587 = vld [vmem:[%s503 + $0x2c] sm:$0xf]
        %v588 = vld [vmem:[%s503 + $0x30] sm:$0xf]
        %v589 = vld [vmem:[%s503 + $0x34] sm:$0xf]
        %v590 = vld [vmem:[%s503 + $0x38] sm:$0xf]
        %v591 = vld [vmem:[%s503 + $0x3c] sm:$0xf]
        %v592 = vunpack.c.l.bf16 %v576
        %v593 = vunpack.c.l.bf16 %v577
        %v594 = vunpack.c.l.bf16 %v578
        %v595 = vunpack.c.l.bf16 %v579
        %v596 = vunpack.c.l.bf16 %v580
        %v597 = vunpack.c.l.bf16 %v581
        %v598 = vunpack.c.l.bf16 %v582
        %v599 = vunpack.c.l.bf16 %v583
        %v600 = vunpack.c.l.bf16 %v584
        %v601 = vunpack.c.l.bf16 %v585
        %v602 = vunpack.c.l.bf16 %v586
        %v603 = vunpack.c.l.bf16 %v587
        %v604 = vunpack.c.l.bf16 %v588
        %v605 = vunpack.c.l.bf16 %v589
        %v606 = vunpack.c.l.bf16 %v590
        %v607 = vunpack.c.l.bf16 %v591
        %v608 = vld [vmem:[#allocation2] sm:$0xff]
        %610 = vset.pattern.permute.xlu0 0
        %611 = vperm.xlu0 %610, %v560
        %v612 = vpop.permute.xlu0 %611
        %615 = vset.pattern.permute.xlu0 0
        %616 = vperm.xlu0 %615, %v561
        %v617 = vpop.permute.xlu0 %616
        %620 = vset.pattern.permute.xlu0 0
        %621 = vperm.xlu0 %620, %v562
        %v622 = vpop.permute.xlu0 %621
        %625 = vset.pattern.permute.xlu0 0
        %626 = vperm.xlu0 %625, %v563
        %v627 = vpop.permute.xlu0 %626
        %630 = vset.pattern.permute.xlu0 0
        %631 = vperm.xlu0 %630, %v564
        %v632 = vpop.permute.xlu0 %631
        %635 = vset.pattern.permute.xlu0 0
        %636 = vperm.xlu0 %635, %v565
        %v637 = vpop.permute.xlu0 %636
        %640 = vset.pattern.permute.xlu0 0
        %641 = vperm.xlu0 %640, %v566
        %v642 = vpop.permute.xlu0 %641
        %645 = vset.pattern.permute.xlu0 0
        %646 = vperm.xlu0 %645, %v567
        %v647 = vpop.permute.xlu0 %646
        %650 = vset.pattern.permute.xlu0 0
        %651 = vperm.xlu0 %650, %v568
        %v652 = vpop.permute.xlu0 %651
        %655 = vset.pattern.permute.xlu0 0
        %656 = vperm.xlu0 %655, %v569
        %v657 = vpop.permute.xlu0 %656
        %660 = vset.pattern.permute.xlu0 0
        %661 = vperm.xlu0 %660, %v570
        %v662 = vpop.permute.xlu0 %661
        %665 = vset.pattern.permute.xlu0 0
        %666 = vperm.xlu0 %665, %v571
        %v667 = vpop.permute.xlu0 %666
        %670 = vset.pattern.permute.xlu0 0
        %671 = vperm.xlu0 %670, %v572
        %v672 = vpop.permute.xlu0 %671
        %675 = vset.pattern.permute.xlu0 0
        %676 = vperm.xlu0 %675, %v573
        %v677 = vpop.permute.xlu0 %676
        %680 = vset.pattern.permute.xlu0 0
        %681 = vperm.xlu0 %680, %v574
        %v682 = vpop.permute.xlu0 %681
        %685 = vset.pattern.permute.xlu0 0
        %686 = vperm.xlu0 %685, %v575
        %v687 = vpop.permute.xlu0 %686
        %v689 = vmul.f32 %v592, %v612
        %v690 = vmul.f32 %v593, %v617
        %v691 = vmul.f32 %v594, %v622
        %v692 = vmul.f32 %v595, %v627
        %v693 = vmul.f32 %v596, %v632
        %v694 = vmul.f32 %v597, %v637
        %v695 = vmul.f32 %v598, %v642
        %v696 = vmul.f32 %v599, %v647
        %v697 = vmul.f32 %v600, %v652
        %v698 = vmul.f32 %v601, %v657
        %v699 = vmul.f32 %v602, %v662
        %v700 = vmul.f32 %v603, %v667
        %v701 = vmul.f32 %v604, %v672
        %v702 = vmul.f32 %v605, %v677
        %v703 = vmul.f32 %v606, %v682
        %v704 = vmul.f32 %v607, %v687
        %vm705 = vcmask 261120
        %v706 = vsel %vm705, %v689, 0.0
        %v707 = vsel %vm705, %v690, 0.0
        %v708 = vadd.f32 %v706, %v707
        %v709 = vrot.slane %v708, 4
        %v710 = vadd.f32 %v708, %v709
        %v711 = vrot.slane %v710, 2
        %v712 = vadd.f32 %v710, %v711
        %v713 = vrot.slane %v712, 1
        %v714 = vadd.f32 %v712, %v713
        %v715 = vsel %vm705, %v691, 0.0
        %v716 = vsel %vm705, %v692, 0.0
        %v717 = vadd.f32 %v715, %v716
        %v718 = vrot.slane %v717, 4
        %v719 = vadd.f32 %v717, %v718
        %v720 = vrot.slane %v719, 2
        %v721 = vadd.f32 %v719, %v720
        %v722 = vrot.slane %v721, 1
        %v723 = vadd.f32 %v721, %v722
        %v724 = vsel %vm705, %v693, 0.0
        %v725 = vsel %vm705, %v694, 0.0
        %v726 = vadd.f32 %v724, %v725
        %v727 = vrot.slane %v726, 4
        %v728 = vadd.f32 %v726, %v727
        %v729 = vrot.slane %v728, 2
        %v730 = vadd.f32 %v728, %v729
        %v731 = vrot.slane %v730, 1
        %v732 = vadd.f32 %v730, %v731
        %v733 = vsel %vm705, %v695, 0.0
        %v734 = vsel %vm705, %v696, 0.0
        %v735 = vadd.f32 %v733, %v734
        %v736 = vrot.slane %v735, 4
        %v737 = vadd.f32 %v735, %v736
        %v738 = vrot.slane %v737, 2
        %v739 = vadd.f32 %v737, %v738
        %v740 = vrot.slane %v739, 1
        %v741 = vadd.f32 %v739, %v740
        %v742 = vsel %vm705, %v697, 0.0
        %v743 = vsel %vm705, %v698, 0.0
        %v744 = vadd.f32 %v742, %v743
        %v745 = vrot.slane %v744, 4
        %v746 = vadd.f32 %v744, %v745
        %v747 = vrot.slane %v746, 2
        %v748 = vadd.f32 %v746, %v747
        %v749 = vrot.slane %v748, 1
        %v750 = vadd.f32 %v748, %v749
        %v751 = vsel %vm705, %v699, 0.0
        %v752 = vsel %vm705, %v700, 0.0
        %v753 = vadd.f32 %v751, %v752
        %v754 = vrot.slane %v753, 4
        %v755 = vadd.f32 %v753, %v754
        %v756 = vrot.slane %v755, 2
        %v757 = vadd.f32 %v755, %v756
        %v758 = vrot.slane %v757, 1
        %v759 = vadd.f32 %v757, %v758
        %v760 = vsel %vm705, %v701, 0.0
        %v761 = vsel %vm705, %v702, 0.0
        %v762 = vadd.f32 %v760, %v761
        %v763 = vrot.slane %v762, 4
        %v764 = vadd.f32 %v762, %v763
        %v765 = vrot.slane %v764, 2
        %v766 = vadd.f32 %v764, %v765
        %v767 = vrot.slane %v766, 1
        %v768 = vadd.f32 %v766, %v767
        %v769 = vsel %vm705, %v703, 0.0
        %v770 = vsel %vm705, %v704, 0.0
        %v771 = vadd.f32 %v769, %v770
        %v772 = vrot.slane %v771, 4
        %v773 = vadd.f32 %v771, %v772
        %v774 = vrot.slane %v773, 2
        %v775 = vadd.f32 %v773, %v774
        %v776 = vrot.slane %v775, 1
        %v777 = vadd.f32 %v775, %v776
        %vm786 = vcmask 1041409
        %v787 = vsel %vm786, %v723, %v714
        %vm788 = vcmask 1042434
        %v789 = vsel %vm788, %v732, %v787
        %vm790 = vcmask 1043459
        %v791 = vsel %vm790, %v741, %v789
        %vm792 = vcmask 1044484
        %v793 = vsel %vm792, %v750, %v791
        %vm794 = vcmask 1045509
        %v795 = vsel %vm794, %v759, %v793
        %vm796 = vcmask 1046534
        %v797 = vsel %vm796, %v768, %v795
        %vm798 = vcmask 1047559
        %v799 = vsel %vm798, %v777, %v797
        %v801 = vadd.f32 %v608, %v799
        %802 = vst.msk [vmem:[#allocation2] sm:$0xff] %vm705, %v801
        %v803 = vld [vmem:[#allocation3] sm:$0xff]
        %vm804 = vcmask 7168
        %v805 = vsel %vm804, %v560, 0.0
        %v806 = vsel %vm804, %v561, 0.0
        %v807 = vadd.f32 %v805, %v806
        %v808 = vrot.slane %v807, 4
        %v809 = vadd.f32 %v807, %v808
        %v810 = vrot.slane %v809, 2
        %v811 = vadd.f32 %v809, %v810
        %v812 = vrot.slane %v811, 1
        %v813 = vadd.f32 %v811, %v812
        %v814 = vsel %vm804, %v562, 0.0
        %v815 = vsel %vm804, %v563, 0.0
        %v816 = vadd.f32 %v814, %v815
        %v817 = vrot.slane %v816, 4
        %v818 = vadd.f32 %v816, %v817
        %v819 = vrot.slane %v818, 2
        %v820 = vadd.f32 %v818, %v819
        %v821 = vrot.slane %v820, 1
        %v822 = vadd.f32 %v820, %v821
        %v823 = vsel %vm804, %v564, 0.0
        %v824 = vsel %vm804, %v565, 0.0
        %v825 = vadd.f32 %v823, %v824
        %v826 = vrot.slane %v825, 4
        %v827 = vadd.f32 %v825, %v826
        %v828 = vrot.slane %v827, 2
        %v829 = vadd.f32 %v827, %v828
        %v830 = vrot.slane %v829, 1
        %v831 = vadd.f32 %v829, %v830
        %v832 = vsel %vm804, %v566, 0.0
        %v833 = vsel %vm804, %v567, 0.0
        %v834 = vadd.f32 %v832, %v833
        %v835 = vrot.slane %v834, 4
        %v836 = vadd.f32 %v834, %v835
        %v837 = vrot.slane %v836, 2
        %v838 = vadd.f32 %v836, %v837
        %v839 = vrot.slane %v838, 1
        %v840 = vadd.f32 %v838, %v839
        %v841 = vsel %vm804, %v568, 0.0
        %v842 = vsel %vm804, %v569, 0.0
        %v843 = vadd.f32 %v841, %v842
        %v844 = vrot.slane %v843, 4
        %v845 = vadd.f32 %v843, %v844
        %v846 = vrot.slane %v845, 2
        %v847 = vadd.f32 %v845, %v846
        %v848 = vrot.slane %v847, 1
        %v849 = vadd.f32 %v847, %v848
        %v850 = vsel %vm804, %v570, 0.0
        %v851 = vsel %vm804, %v571, 0.0
        %v852 = vadd.f32 %v850, %v851
        %v853 = vrot.slane %v852, 4
        %v854 = vadd.f32 %v852, %v853
        %v855 = vrot.slane %v854, 2
        %v856 = vadd.f32 %v854, %v855
        %v857 = vrot.slane %v856, 1
        %v858 = vadd.f32 %v856, %v857
        %v859 = vsel %vm804, %v572, 0.0
        %v860 = vsel %vm804, %v573, 0.0
        %v861 = vadd.f32 %v859, %v860
        %v862 = vrot.slane %v861, 4
        %v863 = vadd.f32 %v861, %v862
        %v864 = vrot.slane %v863, 2
        %v865 = vadd.f32 %v863, %v864
        %v866 = vrot.slane %v865, 1
        %v867 = vadd.f32 %v865, %v866
        %v868 = vsel %vm804, %v574, 0.0
        %v869 = vsel %vm804, %v575, 0.0
        %v870 = vadd.f32 %v868, %v869
        %v871 = vrot.slane %v870, 4
        %v872 = vadd.f32 %v870, %v871
        %v873 = vrot.slane %v872, 2
        %v874 = vadd.f32 %v872, %v873
        %v875 = vrot.slane %v874, 1
        %v876 = vadd.f32 %v874, %v875
        %v885 = vsel %vm786, %v822, %v813
        %v886 = vsel %vm788, %v831, %v885
        %v887 = vsel %vm790, %v840, %v886
        %v888 = vsel %vm792, %v849, %v887
        %v889 = vsel %vm794, %v858, %v888
        %v890 = vsel %vm796, %v867, %v889
        %v891 = vsel %vm798, %v876, %v890
        %v893 = vadd.f32 %v803, %v891
        %894 = vst.msk [vmem:[#allocation3] sm:$0xff] %vm804, %v893
        %p895 = scmp.eq.s32.totalorder %s26, 2
        // Predicated region
        $region136: #{tpu_custom_call.1} parent=122 // pred_check
          %p896 = pneg %p895
        $region137: #{tpu_custom_call.1} parent=122 // pred_check_branch
          %898 = sbr.rel (%p896) target = $region139
        $region138: #{tpu_custom_call.1} parent=122 // pred_region
          %v899 = vld [vmem:[#allocation3] sm:$0xff]
          %v900 = vmax.f32 %v899, 1e-09
          %v901 = vld [vmem:[#allocation2] sm:$0xff]
          %903 = vset.pattern.permute.xlu0 0
          %904 = vperm.xlu0 %903, %v900
          %v905 = vpop.permute.xlu0 %904
          %v907 = vrcp.pop %v905
          %v908 = vmul.f32 %v905, %v907
          %v909 = vsub.f32 1.0, %v908
          %v910 = vmul.f32 %v907, %v909
          %v911 = vadd.f32 %v907, %v910
          %vm912 = vweird.f32 %v905
          %vm913 = vweird.f32 %v907
          %vm914 = vmor %vm912, %vm913
          %v915 = vsel %vm914, %v907, %v911
          %v916 = vand.u32 2147483647, %v905
          %vm917 = vcmp.eq.f32.partialorder %v916, 8.507059e+37
          %v918 = vand.u32 %v905, 2147483648
          %v919 = vor.u32 1.1754944e-38, %v918
          %v920 = vsel %vm917, %v919, %v915
          %v921 = vmul.f32 %v901, %v920
          %v922 = vld [vmem:[%s2] sm:$0xff]
          %v923 = vld [vmem:[%s2 + $0x8] sm:$0xff]
          %v924 = vld [vmem:[%s2 + $0x10] sm:$0xff]
          %v925 = vld [vmem:[%s2 + $0x18] sm:$0xff]
          %v926 = vld [vmem:[%s3] sm:$0x1]
          %v928 = vperm.slane %v926, 0
          %v931 = vsel %vm705, %v921, 0
          %933 = vmatpush.msra.mxu0 0.0
          %934 = vmatpush.msra.mxu0 0.0
          %935 = vmatpush.msra.mxu0 0.0
          %936 = vmatpush.msra.mxu0 0.0
          %937 = vmatpush.msra.mxu0 0.0
          %938 = vmatpush.msra.mxu0 0.0
          %939 = vmatpush.msra.mxu0 0.0
          %940 = vmatpush.msra.mxu0 0.0
          %941 = vmatpush.msra.mxu0 0.0
          %942 = vmatpush.msra.mxu0 0.0
          %943 = vmatpush.msra.mxu0 0.0
          %944 = vmatpush.msra.mxu0 0.0
          %945 = vmatpush.msra.mxu0 %v925
          %946 = vmatpush.msra.mxu0 %v924
          %947 = vmatpush.msra.mxu0 %v923
          %948 = vmatpush.msra.mxu0 %v922
          %949 = vmatmul.f32.gmra.mxu0 %v931
          %v950 = vpop.f32.mrf.mxu0
          %v951 = vadd.f32 %v928, %v950
          %952 = vdwg.mxu0
          %v953 = vmax.f32 %v951, 0.0
          %v954 = vld [vmem:[%s4] sm:$0xff]
          %v955 = vld [vmem:[%s4 + $0x8] sm:$0xff]
          %v956 = vld [vmem:[%s4 + $0x10] sm:$0xff]
          %v957 = vld [vmem:[%s4 + $0x18] sm:$0xff]
          %v958 = vld [vmem:[%s4 + $0x20] sm:$0xff]
          %v959 = vld [vmem:[%s4 + $0x28] sm:$0xff]
          %v960 = vld [vmem:[%s4 + $0x30] sm:$0xff]
          %v961 = vld [vmem:[%s4 + $0x38] sm:$0xff]
          %v962 = vld [vmem:[%s5] sm:$0x1]
          %v964 = vperm.slane %v962, 0
          %vm966 = vcmask 523264
          %v968 = vsel %vm966, %v953, 0
          %970 = vmatpush.msra.mxu0 0.0
          %971 = vmatpush.msra.mxu0 0.0
          %972 = vmatpush.msra.mxu0 0.0
          %973 = vmatpush.msra.mxu0 0.0
          %974 = vmatpush.msra.mxu0 0.0
          %975 = vmatpush.msra.mxu0 0.0
          %976 = vmatpush.msra.mxu0 0.0
          %977 = vmatpush.msra.mxu0 0.0
          %978 = vmatpush.msra.mxu0 %v961
          %979 = vmatpush.msra.mxu0 %v960
          %980 = vmatpush.msra.mxu0 %v959
          %981 = vmatpush.msra.mxu0 %v958
          %982 = vmatpush.msra.mxu0 %v957
          %983 = vmatpush.msra.mxu0 %v956
          %984 = vmatpush.msra.mxu0 %v955
          %985 = vmatpush.msra.mxu0 %v954
          %986 = vmatmul.f32.gmra.mxu0 %v968
          %v987 = vpop.f32.mrf.mxu0
          %v988 = vadd.f32 %v964, %v987
          %989 = vdwg.mxu0
          %v990 = vmax.f32 %v988, 0.0
          %v991 = vld [vmem:[%s6] sm:$0x1]
          %v993 = vperm.slane %v991, 0
          %v995 = vmul.f32 %v990, %v993
          %vm996 = vcmask 130048
          %v997 = vsel %vm996, %v995, 0.0
          %998 = vadd.xlane.f32.xlu0 %v997
          %v999 = vpop.xlane.xlu0 %998
          %v1000 = vld [vmem:[#allocation4] sm:$0x1]
          %v1002 = vperm.slane %v1000, 0
          %v1004 = vadd.f32 %v999, %v1002
          %1005 = vst.msk [vmem:[%s551] sm:$0xff] %vm804, %v1004
        $region139: #{tpu_custom_call.1} parent=122 // pred_fallthru
          _
        %p1006 = scmp.lt.s32.totalorder %s25, 0
        %s1007 = scalar_select %p1006, %s25, 0
        %s1008 = smul.addr %s1007, 8
        %s1009 = scalar_lea.vmem %s8, %s1008
        // Predicated region
        $region140: #{tpu_custom_call.1} parent=122 // pred_check
          %p1010 = pneg %p233
        $region141: #{tpu_custom_call.1} parent=122 // pred_check_branch
          %1012 = sbr.rel (%p1010) target = $region143
        $region142: #{tpu_custom_call.1} parent=122 // pred_region
          _
        $region143: #{tpu_custom_call.1} parent=122 // pred_fallthru
          _
        // Predicated region
        $region144: #{tpu_custom_call.1} parent=122 // pred_check
          %p1013 = pneg %p233
        $region145: #{tpu_custom_call.1} parent=122 // pred_check_branch
          %1015 = sbr.rel (%p1013) target = $region147
        $region146: #{tpu_custom_call.1} parent=122 // pred_region
          %p1016 = scmp.lt.s32.totalorder %s25, 0
          %s1017 = scalar_select %p1016, %s25, 0
          %s1018 = smul.addr %s1017, 8
          %s1019 = scalar_lea.vmem %s8, %s1018
        $region147: #{tpu_custom_call.1} parent=122 // pred_fallthru
          _
      $region123: #{tpu_custom_call.1} parent=5 // pred_fallthru
        _
      %p1020 = scmp.le.s32.totalorder 2, %s16
      // Predicated region
      $region148: #{tpu_custom_call.1} parent=5 // pred_check
        %p1021 = pneg %p1020
      $region149: #{tpu_custom_call.1} parent=5 // pred_check_branch
        %1023 = sbr.rel (%p1021) target = $region151
      $region150: #{tpu_custom_call.1} parent=5 // pred_region
        %s1024 = ssub.s32 %s16, 2
      $region151: #{tpu_custom_call.1} parent=5 // pred_fallthru
        _
    $region6: #{tpu_custom_call.1} parent=1 // loop_footer
      %s20 = sadd.s32 1, %s16
    $region7: #{tpu_custom_call.1} parent=1 // loop_footer_branch
      %15 = sbr.rel target = $region3
    $region8: #{tpu_custom_call.1} parent=1 // loop_exit
      _

</llo_original>
